<compile_context>
chip_gen: v5e
topology: v5e:2x2
jax: 0.10.0
libtpu: 0.0.40
codegen_flags: <defaults>
</compile_context>

<pallas_src>
import functools

import jax
import jax.numpy as jnp
from jax import lax
from jax.experimental import pallas as pl
from jax.experimental.pallas import tpu as pltpu


def _make_cls_attention_kernel(block_b, compute_dtype):
    def kernel(feats_ref, wct_ref, out_ref):
        # feats_ref: (block_b, HW, F)   wct_ref: (F, Ccls)   out_ref: (block_b, Ccls, F)
        for b in range(block_b):                         # static unroll over the batch tile
            # 1x1 conv == (HW, F) @ (F, Ccls) on the MXU, f32 accumulation.
            logits = jnp.dot(feats_ref[b], wct_ref[...],
                             preferred_element_type=jnp.float32)          # (HW, Ccls)
            # numerically-stable softmax over the spatial (HW) axis, in f32
            m = jnp.max(logits, axis=0, keepdims=True)                    # (1, Ccls)
            p = jnp.exp(logits - m)                                       # (HW, Ccls)
            denom = jnp.sum(p, axis=0, keepdims=True)                     # (1, Ccls)
            att = (p / denom).astype(compute_dtype)                       # exact normalization
            # cls_feats = att^T @ feats: contract the leading HW axis of both.
            # The big (HW, F) operand is the RHS in its natural (K, N)
            # orientation -> no large transpose is materialized.
            cls_b = lax.dot_general(
                att, feats_ref[b],
                dimension_numbers=(((0,), (0,)), ((), ())),
                preferred_element_type=jnp.float32)                       # (Ccls, F)
            out_ref[b] = cls_b.astype(out_ref.dtype)                      # lane-dense store
    return kernel


def cls_attention(feats_nchw, channel_w, *, block_b=None,
                  compute_dtype=jnp.bfloat16, out_dtype=jnp.float32):
    """Pallas ClsAttention.forward.

    feats_nchw : (B, F, H, W)  backbone feature map (NCHW, like the reference)
    channel_w  : (Ccls, F)     Conv2d(F, Ccls, 1, bias=False) weight, squeezed
    returns    : (B, Ccls, F)  class-attended features
    """
    B, F, H, W = feats_nchw.shape
    Ccls = channel_w.shape[0]
    HW = H * W
    if block_b is None:
        # Two grid steps by default: amortizes per-step overhead while keeping
        # >=2 independent "parallel" steps so v7x can use both TensorCores.
        block_b = B if B <= 1 else max(d for d in range(1, B // 2 + 1) if B % d == 0)
    assert B % block_b == 0, "batch must be divisible by block_b"

    # Layout/dtype plumbing stays in the wrapper (cheap XLA ops, not kernel work):
    #   feats  -> (B, HW, F): lane dim is F (dense); whole batch tile contiguous in HBM.
    #   weight -> (F, Ccls):  natural (K, N) orientation for the MXU.
    feats = jnp.transpose(feats_nchw.reshape(B, F, HW), (0, 2, 1)).astype(compute_dtype)
    wct = jnp.transpose(channel_w).astype(compute_dtype)

    return pl.pallas_call(
        _make_cls_attention_kernel(block_b, compute_dtype),
        out_shape=jax.ShapeDtypeStruct((B, Ccls, F), out_dtype),
        grid=(B // block_b,),
        in_specs=[
            pl.BlockSpec((block_b, HW, F), lambda i: (i, 0, 0)),
            pl.BlockSpec((F, Ccls), lambda i: (0, 0)),
        ],
        out_specs=pl.BlockSpec((block_b, Ccls, F), lambda i: (i, 0, 0)),
        compiler_params=pltpu.CompilerParams(
            dimension_semantics=("parallel",)),   # batch tiles are independent
    )(feats, wct)


def cls_attention_ref(feats_nchw, channel_w, compute_dtype):
    """Pure-JAX reference matching the PyTorch module (same operand casts)."""
    B, F, H, W = feats_nchw.shape
    f = feats_nchw.reshape(B, F, H * W).astype(compute_dtype)
    wc = channel_w.astype(compute_dtype)
    logits = jnp.einsum('cf,bfn->bcn', wc, f, preferred_element_type=jnp.float32)
    att = jax.nn.softmax(logits, axis=2)
    return jnp.einsum('bcn,bfn->bcf', att.astype(compute_dtype), f,
                      preferred_element_type=jnp.float32)


if __name__ == "__main__":
    B, F, H, W = 4, 256, 7, 7       # small stand-in for the real (16, 1280, 7, 7)
    NUM_CLASSES = 7

    key = jax.random.PRNGKey(0)
    k_feat, k_w = jax.random.split(key)
    feats = jax.random.normal(k_feat, (B, F, H, W), dtype=jnp.float32)
    channel_w = jax.random.normal(k_w, (NUM_CLASSES, F), dtype=jnp.float32) * (F ** -0.5)

    # f32 path: tight check against the pure-JAX reference
    fwd_f32 = jax.jit(functools.partial(cls_attention, block_b=2,
                                        compute_dtype=jnp.float32))
    out_f32 = fwd_f32(feats, channel_w)
    jax.block_until_ready(out_f32)
    ref_f32 = cls_attention_ref(feats, channel_w, jnp.float32)
    assert out_f32.shape == (B, NUM_CLASSES, F)
    assert jnp.allclose(out_f32, ref_f32, atol=2e-3, rtol=2e-3), \
        float(jnp.max(jnp.abs(out_f32 - ref_f32)))

    # bf16-matmul path (default; v6e/v7x MXU rate, half the DMA bytes),
    # f32 softmax / accumulation inside the kernel.
    fwd_bf16 = jax.jit(functools.partial(cls_attention, compute_dtype=jnp.bfloat16))
    out_bf16 = fwd_bf16(feats, channel_w)
    jax.block_until_ready(out_bf16)
    ref_bf16 = cls_attention_ref(feats, channel_w, jnp.bfloat16)
    assert out_bf16.shape == (B, NUM_CLASSES, F)
    assert jnp.allclose(out_bf16, ref_bf16, atol=3e-2, rtol=3e-2), \
        float(jnp.max(jnp.abs(out_bf16 - ref_bf16)))

    print("KERNEL_OK")
</pallas_src>

<mosaic_0001>
module attributes {stable_mosaic.version = 11 : i64} {
  func.func @kernel(%arg0: i32, %arg1: memref<2x49x256xf32, #tpu.memory_space<vmem>>, %arg2: memref<256x7xf32, #tpu.memory_space<vmem>>, %arg3: memref<2x7x256xf32, #tpu.memory_space<vmem>>) attributes {dimension_semantics = [#tpu.dimension_semantics<parallel>], iteration_bounds = array<i64: 2>, scalar_prefetch = 0 : i64, scratch_operands = 0 : i64, tpu.core_type = #tpu.core_type<tc>, window_params = [{transform_indices = @transform_0, window_bounds = array<i64: 2, 49, 256>}, {pipeline_mode = #tpu.pipeline_mode<synchronous>, transform_indices = @transform_1, window_bounds = array<i64: 256, 7>}, {transform_indices = @transform_2, window_bounds = array<i64: 2, 7, 256>}]} {
    %c0 = arith.constant 0 : index
    %c0_0 = arith.constant 0 : index
    %c0_1 = arith.constant 0 : index
    %0 = vector.load %arg1[%c0, %c0_0, %c0_1] : memref<2x49x256xf32, #tpu.memory_space<vmem>>, vector<1x49x256xf32>
    %1 = vector.shape_cast %0 : vector<1x49x256xf32> to vector<49x256xf32>
    %c0_2 = arith.constant 0 : index
    %c0_3 = arith.constant 0 : index
    %2 = vector.load %arg2[%c0_2, %c0_3] : memref<256x7xf32, #tpu.memory_space<vmem>>, vector<256x7xf32>
    %cst = arith.constant dense<0.000000e+00> : vector<49x7xf32>
    %3 = tpu.matmul %1, %2, %cst {dimension_numbers = #tpu.dot_dimension_numbers<[1], [0], [0], [1], [0, 0, 1, 1], [], []>} : vector<49x256xf32>, vector<256x7xf32>, vector<49x7xf32> -> vector<49x7xf32>
    %cst_4 = arith.constant dense<0xFF800000> : vector<7xf32>
    %4 = vector.multi_reduction <maximumf>, %3, %cst_4 [0] : vector<49x7xf32> to vector<7xf32>
    %5 = vector.shape_cast %4 : vector<7xf32> to vector<1x7xf32>
    %6 = vector.broadcast %5 : vector<1x7xf32> to vector<49x7xf32>
    %7 = arith.subf %3, %6 : vector<49x7xf32>
    %8 = math.exp %7 : vector<49x7xf32>
    %cst_5 = arith.constant dense<0.000000e+00> : vector<7xf32>
    %9 = vector.multi_reduction <add>, %8, %cst_5 [0] : vector<49x7xf32> to vector<7xf32>
    %10 = vector.shape_cast %9 : vector<7xf32> to vector<1x7xf32>
    %11 = vector.broadcast %10 : vector<1x7xf32> to vector<49x7xf32>
    %12 = arith.divf %8, %11 : vector<49x7xf32>
    %c0_6 = arith.constant 0 : index
    %c0_7 = arith.constant 0 : index
    %c0_8 = arith.constant 0 : index
    %13 = vector.load %arg1[%c0_6, %c0_7, %c0_8] : memref<2x49x256xf32, #tpu.memory_space<vmem>>, vector<1x49x256xf32>
    %14 = vector.shape_cast %13 : vector<1x49x256xf32> to vector<49x256xf32>
    %cst_9 = arith.constant dense<0.000000e+00> : vector<7x256xf32>
    %15 = tpu.matmul %12, %14, %cst_9 {dimension_numbers = #tpu.dot_dimension_numbers<[0], [0], [1], [1], [0, 1, 1, 1], [], []>} : vector<49x7xf32>, vector<49x256xf32>, vector<7x256xf32> -> vector<7x256xf32>
    %c0_10 = arith.constant 0 : index
    %c0_11 = arith.constant 0 : index
    %c0_12 = arith.constant 0 : index
    %16 = vector.load %arg3[%c0_10, %c0_11, %c0_12] : memref<2x7x256xf32, #tpu.memory_space<vmem>>, vector<1x7x256xf32>
    %17 = vector.shape_cast %16 : vector<1x7x256xf32> to vector<7x256xf32>
    %18 = vector.shape_cast %15 : vector<7x256xf32> to vector<1x7x256xf32>
    tpu.vector_store %arg3[%c0_10, %c0_11, %c0_12], %18 {strides = array<i32>} : memref<2x7x256xf32, #tpu.memory_space<vmem>>, vector<1x7x256xf32>,
    %c1 = arith.constant 1 : index
    %c0_13 = arith.constant 0 : index
    %c0_14 = arith.constant 0 : index
    %19 = vector.load %arg1[%c1, %c0_13, %c0_14] : memref<2x49x256xf32, #tpu.memory_space<vmem>>, vector<1x49x256xf32>
    %20 = vector.shape_cast %19 : vector<1x49x256xf32> to vector<49x256xf32>
    %c0_15 = arith.constant 0 : index
    %c0_16 = arith.constant 0 : index
    %21 = vector.load %arg2[%c0_15, %c0_16] : memref<256x7xf32, #tpu.memory_space<vmem>>, vector<256x7xf32>
    %cst_17 = arith.constant dense<0.000000e+00> : vector<49x7xf32>
    %22 = tpu.matmul %20, %21, %cst_17 {dimension_numbers = #tpu.dot_dimension_numbers<[1], [0], [0], [1], [0, 0, 1, 1], [], []>} : vector<49x256xf32>, vector<256x7xf32>, vector<49x7xf32> -> vector<49x7xf32>
    %cst_18 = arith.constant dense<0xFF800000> : vector<7xf32>
    %23 = vector.multi_reduction <maximumf>, %22, %cst_18 [0] : vector<49x7xf32> to vector<7xf32>
    %24 = vector.shape_cast %23 : vector<7xf32> to vector<1x7xf32>
    %25 = vector.broadcast %24 : vector<1x7xf32> to vector<49x7xf32>
    %26 = arith.subf %22, %25 : vector<49x7xf32>
    %27 = math.exp %26 : vector<49x7xf32>
    %cst_19 = arith.constant dense<0.000000e+00> : vector<7xf32>
    %28 = vector.multi_reduction <add>, %27, %cst_19 [0] : vector<49x7xf32> to vector<7xf32>
    %29 = vector.shape_cast %28 : vector<7xf32> to vector<1x7xf32>
    %30 = vector.broadcast %29 : vector<1x7xf32> to vector<49x7xf32>
    %31 = arith.divf %27, %30 : vector<49x7xf32>
    %c1_20 = arith.constant 1 : index
    %c0_21 = arith.constant 0 : index
    %c0_22 = arith.constant 0 : index
    %32 = vector.load %arg1[%c1_20, %c0_21, %c0_22] : memref<2x49x256xf32, #tpu.memory_space<vmem>>, vector<1x49x256xf32>
    %33 = vector.shape_cast %32 : vector<1x49x256xf32> to vector<49x256xf32>
    %cst_23 = arith.constant dense<0.000000e+00> : vector<7x256xf32>
    %34 = tpu.matmul %31, %33, %cst_23 {dimension_numbers = #tpu.dot_dimension_numbers<[0], [0], [1], [1], [0, 1, 1, 1], [], []>} : vector<49x7xf32>, vector<49x256xf32>, vector<7x256xf32> -> vector<7x256xf32>
    %c1_24 = arith.constant 1 : index
    %c0_25 = arith.constant 0 : index
    %c0_26 = arith.constant 0 : index
    %35 = vector.load %arg3[%c1_24, %c0_25, %c0_26] : memref<2x7x256xf32, #tpu.memory_space<vmem>>, vector<1x7x256xf32>
    %36 = vector.shape_cast %35 : vector<1x7x256xf32> to vector<7x256xf32>
    %37 = vector.shape_cast %34 : vector<7x256xf32> to vector<1x7x256xf32>
    tpu.vector_store %arg3[%c1_24, %c0_25, %c0_26], %37 {strides = array<i32>} : memref<2x7x256xf32, #tpu.memory_space<vmem>>, vector<1x7x256xf32>,
    return
  }
  func.func @transform_0(%arg0: i32) -> (i32, i32, i32) {
    %c0_i32 = arith.constant 0 : i32
    %c0_i32_0 = arith.constant 0 : i32
    %c0_i32_1 = arith.constant 0 : i32
    return %arg0, %c0_i32, %c0_i32_0 : i32, i32, i32
  }
  func.func @transform_1(%arg0: i32) -> (i32, i32) {
    %c0_i32 = arith.constant 0 : i32
    %c0_i32_0 = arith.constant 0 : i32
    %c0_i32_1 = arith.constant 0 : i32
    return %c0_i32, %c0_i32_0 : i32, i32
  }
  func.func @transform_2(%arg0: i32) -> (i32, i32, i32) {
    %c0_i32 = arith.constant 0 : i32
    %c0_i32_0 = arith.constant 0 : i32
    %c0_i32_1 = arith.constant 0 : i32
    return %arg0, %c0_i32, %c0_i32_0 : i32, i32, i32
  }
}

</mosaic_0001>

<llo_original>
// kernel: cls_attention.1
$region0: #{cls_attention.1}
  #allocation0 [shape = 'u32[]', space=smem, size = 0x4, offset = 0x4, fixed_abs, tag = 'smem constant byte address 0x4 - core index']
  #allocation1 [shape = 'u32[72,128]{1,0:T(1,128)}', space=vmem, size = 0x9000, scoped, tag = 'internal scratch']
  %s0 = inlined_call_operand.vmem [shape: f32[4,49,256], index: 0, kind: input, shape index: {}]
  %s1 = inlined_call_operand.vmem [shape: f32[256,7], index: 1, kind: input, shape index: {}]
  %s2 = inlined_call_operand.vmem [shape: f32[4,7,256], index: 2, kind: output, shape index: {}]
  %s3 = sld [smem:[#allocation0]]
  $region41: #{cls_attention.1} parent=0
    _
  %s5 = ssub.s32 1, %s3
  %s6 = scalar_select 0, %s5, %s3
  loop: start=0, step=1, limit=4
  $region2: #{cls_attention.1} parent=0 // loop_pre_header
    _
  $region3: #{cls_attention.1} parent=0 // loop_header
    %s8 = sphi 0, %s12
    %p9 = scmp.ge.s32.totalorder %s8, 4
    %s18 = sphi 0, %s20
    %s21 = sphi 0, %s18
    %s22 = sphi 0, %s21
    %s38 = sphi 0, %s22
    %s42 = sphi 0, %s42
    %s44 = sphi 0, %s42
    %s45 = sphi 0, %s44
    %s59 = sphi 0, %s45
    %s65 = sphi 0, %s67
    %s68 = sphi 0, %s65
    %s69 = sphi 0, %s68
    %s85 = sphi 0, %s69
  $region4: #{cls_attention.1} parent=0 // loop_header_branch
    %11 = sbr.rel (%p9) target = $region8
  $region5: #{cls_attention.1} parent=0 // loop_body
    %s13 = ssub.s32 %s8, 1
    %s14 = ssub.s32 %s8, 2
    %s15 = sadd.s32 %s8, 1
    %s16 = ssub.s32 %s8, %s15
    %p17 = scmp.eq.s32.totalorder %s16, 0
    %s19 = sadd.s32 %s18, 1
    %s20 = scalar_select %p17, %s18, %s19
    %p23 = pneg %p17
    %p24 = scmp.eq.s32.totalorder %s8, 1
    %p25 = por %p23, %p24
    %p26 = scmp.ne.s32.totalorder %s18, %s21
    %p27 = scmp.eq.s32.totalorder %s8, 0
    %p28 = por %p26, %p27
    %p29 = scmp.ne.s32.totalorder %s18, %s21
    %p30 = scmp.eq.s32.totalorder %s13, 1
    %p31 = por %p29, %p30
    %p32 = scmp.ne.s32.totalorder %s21, %s22
    %p33 = scmp.eq.s32.totalorder %s13, 0
    %p34 = por %p32, %p33
    %p35 = scmp.ne.s32.totalorder %s21, %s22
    %p36 = scmp.eq.s32.totalorder %s14, 1
    %p37 = por %p35, %p36
    %p39 = scmp.ne.s32.totalorder %s22, %s38
    %p40 = scmp.eq.s32.totalorder %s14, 0
    %p41 = por %p39, %p40
    %s43 = sadd.s32 %s42, 1
    %p46 = scmp.eq.s32.totalorder %s8, 1
    %p47 = scmp.ne.s32.totalorder %s42, %s44
    %p48 = scmp.eq.s32.totalorder %s8, 0
    %p49 = por %p47, %p48
    %p50 = scmp.ne.s32.totalorder %s42, %s44
    %p51 = scmp.eq.s32.totalorder %s13, 1
    %p52 = por %p50, %p51
    %p53 = scmp.ne.s32.totalorder %s44, %s45
    %p54 = scmp.eq.s32.totalorder %s13, 0
    %p55 = por %p53, %p54
    %p56 = scmp.ne.s32.totalorder %s44, %s45
    %p57 = scmp.eq.s32.totalorder %s14, 1
    %p58 = por %p56, %p57
    %p60 = scmp.ne.s32.totalorder %s45, %s59
    %p61 = scmp.eq.s32.totalorder %s14, 0
    %p62 = por %p60, %p61
    %s63 = ssub.s32 %s8, %s15
    %p64 = scmp.eq.s32.totalorder %s63, 0
    %s66 = sadd.s32 %s65, 1
    %s67 = scalar_select %p64, %s65, %s66
    %p70 = pneg %p64
    %p71 = scmp.eq.s32.totalorder %s8, 1
    %p72 = por %p70, %p71
    %p73 = scmp.ne.s32.totalorder %s65, %s68
    %p74 = scmp.eq.s32.totalorder %s8, 0
    %p75 = por %p73, %p74
    %p76 = scmp.ne.s32.totalorder %s65, %s68
    %p77 = scmp.eq.s32.totalorder %s13, 1
    %p78 = por %p76, %p77
    %p79 = scmp.ne.s32.totalorder %s68, %s69
    %p80 = scmp.eq.s32.totalorder %s13, 0
    %p81 = por %p79, %p80
    %p82 = scmp.ne.s32.totalorder %s68, %s69
    %p83 = scmp.eq.s32.totalorder %s14, 1
    %p84 = por %p82, %p83
    %p86 = scmp.ne.s32.totalorder %s69, %s85
    %p87 = scmp.eq.s32.totalorder %s14, 0
    %p88 = por %p86, %p87
    %p89 = scmp.le.s32.totalorder 1, %s8
    %p90 = scmp.lt.s32.totalorder %s8, 3
    %p91 = pnand %p89, %p90
    %p92 = pneg %p91
    // Predicated region
    $region9: #{cls_attention.1} parent=5 // pred_check
      _
    $region10: #{cls_attention.1} parent=5 // pred_check_branch
      %94 = sbr.rel (%p91) target = $region12
    $region11: #{cls_attention.1} parent=5 // pred_region
      %s95 = ssub.s32 %s8, 1
      // Predicated region
      $region13: #{cls_attention.1} parent=11 // pred_check
        %p96 = pneg %p55
      $region14: #{cls_attention.1} parent=11 // pred_check_branch
        %98 = sbr.rel (%p96) target = $region16
      $region15: #{cls_attention.1} parent=11 // pred_region
        _
      $region16: #{cls_attention.1} parent=11 // pred_fallthru
        _
    $region12: #{cls_attention.1} parent=5 // pred_fallthru
      _
    %p99 = scmp.lt.s32.totalorder %s8, 2
    // Predicated region
    $region17: #{cls_attention.1} parent=5 // pred_check
      %p100 = pneg %p99
    $region18: #{cls_attention.1} parent=5 // pred_check_branch
      %102 = sbr.rel (%p100) target = $region20
    $region19: #{cls_attention.1} parent=5 // pred_region
      // Predicated region
      $region21: #{cls_attention.1} parent=19 // pred_check
        %p103 = pneg %p28
      $region22: #{cls_attention.1} parent=19 // pred_check_branch
        %105 = sbr.rel (%p103) target = $region24
      $region23: #{cls_attention.1} parent=19 // pred_region
        %s106 = smul.u32 2, %s8
        %p107 = scmp.lt.s32.totalorder %s106, 3
        %s108 = scalar_select %p107, %s106, 3
        %s109 = smul.addr %s108, 14
        %s110 = smul.addr %s109, 8
        %s111 = scalar_lea.vmem %s0, %s110
        %s112 = smul.u32 2, %s8
      $region24: #{cls_attention.1} parent=19 // pred_fallthru
        _
    $region20: #{cls_attention.1} parent=5 // pred_fallthru
      _
    %p113 = scmp.le.s32.totalorder 1, %s8
    %p114 = scmp.lt.s32.totalorder %s8, 3
    %p115 = pnand %p113, %p114
    %p116 = pneg %p115
    // Predicated region
    $region25: #{cls_attention.1} parent=5 // pred_check
      _
    $region26: #{cls_attention.1} parent=5 // pred_check_branch
      %118 = sbr.rel (%p115) target = $region28
    $region27: #{cls_attention.1} parent=5 // pred_region
      %s119 = ssub.s32 %s8, 1
      %s120 = smul.u32 2, %s13
      %p121 = scmp.lt.s32.totalorder %s120, 3
      %s122 = scalar_select %p121, %s120, 3
      %s123 = smul.addr %s122, 14
      %s124 = smul.addr %s123, 8
      %s125 = scalar_lea.vmem %s0, %s124
      %p126 = pneg %p34
      %p127 = pneg %p31
      %p128 = pneg %p55
      %p129 = pneg %p52
      %p130 = pneg %p81
      %p131 = pneg %p78
      %s132 = smul.u32 2, %s13
      %p133 = scmp.lt.s32.totalorder %s132, 3
      %s134 = scalar_select %p133, %s132, 3
      %s135 = smul.addr %s134, 2
      %s136 = smul.addr %s135, 8
      %s137 = scalar_lea.vmem %s2, %s136
      %s138 = smul.u32 2, %s13
      %p139 = scmp.lt.s32.totalorder %s138, 3
      %s140 = scalar_select %p139, %s138, 3
      %s141 = smul.addr %s140, 14
      %s142 = smul.addr %s141, 8
      %s143 = scalar_lea.vmem %s0, %s142
      %s144 = smul.u32 2, %s13
      %s145 = smul.u32 2, %s13
      %p146 = scmp.lt.s32.totalorder %s145, 3
      %s147 = scalar_select %p146, %s145, 3
      %s148 = smul.addr %s147, 2
      %s149 = smul.addr %s148, 8
      %s150 = scalar_lea.vmem %s2, %s149
      %s151 = smul.u32 2, %s13
      %v152 = vld [vmem:[%s143] sm:$0xff]
      %v153 = vld [vmem:[%s143 + $0x8] sm:$0xff]
      %v154 = vld [vmem:[%s143 + $0x10] sm:$0xff]
      %v155 = vld [vmem:[%s143 + $0x18] sm:$0xff]
      %v156 = vld [vmem:[%s143 + $0x20] sm:$0xff]
      %v157 = vld [vmem:[%s143 + $0x28] sm:$0xff]
      %v158 = vld [vmem:[%s143 + $0x30] sm:$0xff]
      %v159 = vld [vmem:[%s143 + $0x38] sm:$0xff]
      %v160 = vld [vmem:[%s143 + $0x40] sm:$0xff]
      %v161 = vld [vmem:[%s143 + $0x48] sm:$0xff]
      %v162 = vld [vmem:[%s143 + $0x50] sm:$0xff]
      %v163 = vld [vmem:[%s143 + $0x58] sm:$0xff]
      %v164 = vld [vmem:[%s143 + $0x60] sm:$0x1]
      %v165 = vld [vmem:[%s143 + $0x68] sm:$0x1]
      %v166 = vld [vmem:[%s1] sm:$0xff]
      %v167 = vld [vmem:[%s1 + $0x8] sm:$0xff]
      %v168 = vld [vmem:[%s1 + $0x10] sm:$0xff]
      %v169 = vld [vmem:[%s1 + $0x18] sm:$0xff]
      %v170 = vld [vmem:[%s1 + $0x20] sm:$0xff]
      %v171 = vld [vmem:[%s1 + $0x28] sm:$0xff]
      %v172 = vld [vmem:[%s1 + $0x30] sm:$0xff]
      %v173 = vld [vmem:[%s1 + $0x38] sm:$0xff]
      %v174 = vld [vmem:[%s1 + $0x40] sm:$0xff]
      %v175 = vld [vmem:[%s1 + $0x48] sm:$0xff]
      %v176 = vld [vmem:[%s1 + $0x50] sm:$0xff]
      %v177 = vld [vmem:[%s1 + $0x58] sm:$0xff]
      %v178 = vld [vmem:[%s1 + $0x60] sm:$0xff]
      %v179 = vld [vmem:[%s1 + $0x68] sm:$0xff]
      %v180 = vld [vmem:[%s1 + $0x70] sm:$0xff]
      %v181 = vld [vmem:[%s1 + $0x78] sm:$0xff]
      %v182 = vld [vmem:[%s1 + $0x80] sm:$0xff]
      %v183 = vld [vmem:[%s1 + $0x88] sm:$0xff]
      %v184 = vld [vmem:[%s1 + $0x90] sm:$0xff]
      %v185 = vld [vmem:[%s1 + $0x98] sm:$0xff]
      %v186 = vld [vmem:[%s1 + $0xa0] sm:$0xff]
      %v187 = vld [vmem:[%s1 + $0xa8] sm:$0xff]
      %v188 = vld [vmem:[%s1 + $0xb0] sm:$0xff]
      %v189 = vld [vmem:[%s1 + $0xb8] sm:$0xff]
      %v190 = vld [vmem:[%s1 + $0xc0] sm:$0xff]
      %v191 = vld [vmem:[%s1 + $0xc8] sm:$0xff]
      %v192 = vld [vmem:[%s1 + $0xd0] sm:$0xff]
      %v193 = vld [vmem:[%s1 + $0xd8] sm:$0xff]
      %v194 = vld [vmem:[%s1 + $0xe0] sm:$0xff]
      %v195 = vld [vmem:[%s1 + $0xe8] sm:$0xff]
      %v196 = vld [vmem:[%s1 + $0xf0] sm:$0xff]
      %v197 = vld [vmem:[%s1 + $0xf8] sm:$0xff]
      %198 = vmatpush.msra.mxu0 %v181
      %199 = vmatpush.msra.mxu0 %v180
      %200 = vmatpush.msra.mxu0 %v179
      %201 = vmatpush.msra.mxu0 %v178
      %202 = vmatpush.msra.mxu0 %v177
      %203 = vmatpush.msra.mxu0 %v176
      %204 = vmatpush.msra.mxu0 %v175
      %205 = vmatpush.msra.mxu0 %v174
      %206 = vmatpush.msra.mxu0 %v173
      %207 = vmatpush.msra.mxu0 %v172
      %208 = vmatpush.msra.mxu0 %v171
      %209 = vmatpush.msra.mxu0 %v170
      %210 = vmatpush.msra.mxu0 %v169
      %211 = vmatpush.msra.mxu0 %v168
      %212 = vmatpush.msra.mxu0 %v167
      %213 = vmatpush.msra.mxu0 %v166
      %214 = vmatmul.f32.gmra.mxu0 %v152
      %v215 = vpop.f32.mrf.mxu0
      %v216 = vadd.f32 0.0, %v215
      %217 = vmatmul.f32.gmra.mxu0 %v154
      %v218 = vpop.f32.mrf.mxu0
      %v219 = vadd.f32 0.0, %v218
      %220 = vmatmul.f32.gmra.mxu0 %v156
      %v221 = vpop.f32.mrf.mxu0
      %v222 = vadd.f32 0.0, %v221
      %223 = vmatmul.f32.gmra.mxu0 %v158
      %v224 = vpop.f32.mrf.mxu0
      %v225 = vadd.f32 0.0, %v224
      %226 = vmatmul.f32.gmra.mxu0 %v160
      %v227 = vpop.f32.mrf.mxu0
      %v228 = vadd.f32 0.0, %v227
      %229 = vmatmul.f32.gmra.mxu0 %v162
      %v230 = vpop.f32.mrf.mxu0
      %v231 = vadd.f32 0.0, %v230
      %232 = vmatmul.f32.gmra.mxu0 %v164
      %v233 = vpop.f32.mrf.mxu0
      %v234 = vadd.f32 0.0, %v233
      %235 = vdwg.mxu0
      %236 = vmatpush.msra.mxu0 %v197
      %237 = vmatpush.msra.mxu0 %v196
      %238 = vmatpush.msra.mxu0 %v195
      %239 = vmatpush.msra.mxu0 %v194
      %240 = vmatpush.msra.mxu0 %v193
      %241 = vmatpush.msra.mxu0 %v192
      %242 = vmatpush.msra.mxu0 %v191
      %243 = vmatpush.msra.mxu0 %v190
      %244 = vmatpush.msra.mxu0 %v189
      %245 = vmatpush.msra.mxu0 %v188
      %246 = vmatpush.msra.mxu0 %v187
      %247 = vmatpush.msra.mxu0 %v186
      %248 = vmatpush.msra.mxu0 %v185
      %249 = vmatpush.msra.mxu0 %v184
      %250 = vmatpush.msra.mxu0 %v183
      %251 = vmatpush.msra.mxu0 %v182
      %252 = vmatmul.f32.gmra.mxu0 %v153
      %v253 = vpop.f32.mrf.mxu0
      %v254 = vadd.f32 %v216, %v253
      %255 = vmatmul.f32.gmra.mxu0 %v155
      %v256 = vpop.f32.mrf.mxu0
      %v257 = vadd.f32 %v219, %v256
      %258 = vmatmul.f32.gmra.mxu0 %v157
      %v259 = vpop.f32.mrf.mxu0
      %v260 = vadd.f32 %v222, %v259
      %261 = vmatmul.f32.gmra.mxu0 %v159
      %v262 = vpop.f32.mrf.mxu0
      %v263 = vadd.f32 %v225, %v262
      %264 = vmatmul.f32.gmra.mxu0 %v161
      %v265 = vpop.f32.mrf.mxu0
      %v266 = vadd.f32 %v228, %v265
      %267 = vmatmul.f32.gmra.mxu0 %v163
      %v268 = vpop.f32.mrf.mxu0
      %v269 = vadd.f32 %v231, %v268
      %270 = vmatmul.f32.gmra.mxu0 %v165
      %v271 = vpop.f32.mrf.mxu0
      %v272 = vadd.f32 %v234, %v271
      %273 = vdwg.mxu0
      %vm274 = vcmask 56320
      %v275 = vsel %vm274, %v254, -inf
      %v276 = vsel %vm274, %v257, -inf
      %v277 = vsel %vm274, %v260, -inf
      %v278 = vsel %vm274, %v263, -inf
      %v279 = vsel %vm274, %v266, -inf
      %v280 = vmax.f32 %v275, %v279
      %v281 = vsel %vm274, %v269, -inf
      %v282 = vmax.f32 %v276, %v281
      %vm283 = vcmask 49152
      %v284 = vsel %vm283, %v272, -inf
      %v285 = vmax.f32 %v277, %v284
      %v286 = vmax.f32 %v280, %v282
      %v287 = vmax.f32 %v285, %v278
      %v288 = vmax.f32 %v286, %v287
      %v289 = vrot.slane %v288, 4
      %v290 = vmax.f32 %v288, %v289
      %v291 = vrot.slane %v290, 2
      %v292 = vmax.f32 %v290, %v291
      %v293 = vrot.slane %v292, 1
      %v294 = vmax.f32 %v292, %v293
      %v295 = vsub.f32 %v254, %v294
      %v296 = vsub.f32 %v257, %v294
      %v297 = vsub.f32 %v260, %v294
      %v298 = vsub.f32 %v263, %v294
      %v299 = vsub.f32 %v266, %v294
      %v300 = vsub.f32 %v269, %v294
      %v301 = vsub.f32 %v272, %v294
      %v302 = vmul.f32 %v295, 1.442695
      %v303 = vpow.pop %v302
      %v304 = vmul.f32 %v296, 1.442695
      %v305 = vpow.pop %v304
      %v306 = vmul.f32 %v297, 1.442695
      %v307 = vpow.pop %v306
      %v308 = vmul.f32 %v298, 1.442695
      %v309 = vpow.pop %v308
      %v310 = vmul.f32 %v299, 1.442695
      %v311 = vpow.pop %v310
      %v312 = vmul.f32 %v300, 1.442695
      %v313 = vpow.pop %v312
      %v314 = vmul.f32 %v301, 1.442695
      %v315 = vpow.pop %v314
      %v316 = vsel %vm274, %v303, 0.0
      %v317 = vsel %vm274, %v305, 0.0
      %v318 = vadd.f32 %v316, %v317
      %v319 = vsel %vm274, %v307, 0.0
      %v320 = vadd.f32 %v318, %v319
      %v321 = vsel %vm274, %v309, 0.0
      %v322 = vadd.f32 %v320, %v321
      %v323 = vsel %vm274, %v311, 0.0
      %v324 = vadd.f32 %v322, %v323
      %v325 = vsel %vm274, %v313, 0.0
      %v326 = vadd.f32 %v324, %v325
      %v327 = vsel %vm283, %v315, 0.0
      %v328 = vadd.f32 %v326, %v327
      %v329 = vrot.slane %v328, 4
      %v330 = vadd.f32 %v328, %v329
      %v331 = vrot.slane %v330, 2
      %v332 = vadd.f32 %v330, %v331
      %v333 = vrot.slane %v332, 1
      %v334 = vadd.f32 %v332, %v333
      %v335 = vrcp.pop %v334
      %v336 = vmul.f32 %v334, %v335
      %v337 = vsub.f32 1.0, %v336
      %v338 = vmul.f32 %v335, %v337
      %v339 = vadd.f32 %v335, %v338
      %vm340 = vweird.f32 %v334
      %vm341 = vweird.f32 %v335
      %vm342 = vmor %vm340, %vm341
      %v343 = vsel %vm342, %v335, %v339
      %v344 = vand.u32 2147483647, %v334
      %vm345 = vcmp.eq.f32.partialorder %v344, 8.507059e+37
      %v346 = vand.u32 %v334, 2147483648
      %v347 = vor.u32 1.1754944e-38, %v346
      %v348 = vsel %vm345, %v347, %v343
      %v349 = vmul.f32 %v303, %v348
      %v350 = vmul.f32 %v305, %v348
      %v351 = vmul.f32 %v307, %v348
      %v352 = vmul.f32 %v309, %v348
      %v353 = vmul.f32 %v311, %v348
      %v354 = vmul.f32 %v313, %v348
      %v355 = vmul.f32 %v315, %v348
      %356 = vxpose.xlu0.b32.start [1/16] %v349, 128
      %357 = vxpose.xlu0.b32.cont [2/16] %v350, 128
      %358 = vxpose.xlu0.b32.cont [3/16] %v351, 128
      %359 = vxpose.xlu0.b32.cont [4/16] %v352, 128
      %360 = vxpose.xlu0.b32.cont [5/16] %v353, 128
      %361 = vxpose.xlu0.b32.cont [6/16] %v354, 128
      %362 = vxpose.xlu0.b32.cont [7/16] %v355, 128
      %363 = vxpose.xlu0.b32.cont [8/16] 0.0, 128
      %364 = vxpose.xlu0.b32.cont [9/16] 0.0, 128
      %365 = vxpose.xlu0.b32.cont [10/16] 0.0, 128
      %366 = vxpose.xlu0.b32.cont [11/16] 0.0, 128
      %367 = vxpose.xlu0.b32.cont [12/16] 0.0, 128
      %368 = vxpose.xlu0.b32.cont [13/16] 0.0, 128
      %369 = vxpose.xlu0.b32.cont [14/16] 0.0, 128
      %370 = vxpose.xlu0.b32.cont [15/16] 0.0, 128
      %371 = vxpose.xlu0.b32.end [16/16] 0.0, 128
      %v372 = vpop.trf.xlu0
      %v373 = vpop.trf.xlu0
      %v374 = vpop.trf.xlu0
      %v375 = vpop.trf.xlu0
      %v376 = vpop.trf.xlu0
      %v377 = vpop.trf.xlu0
      %v378 = vpop.trf.xlu0
      %v379 = vpop.trf.xlu0
      %v380 = vpop.trf.xlu0
      %v381 = vpop.trf.xlu0
      %v382 = vpop.trf.xlu0
      %v383 = vpop.trf.xlu0
      %v384 = vpop.trf.xlu0
      %v385 = vpop.trf.xlu0
      %v386 = vpop.trf.xlu0
      %v387 = vpop.trf.xlu0
      %vm388 = vcmask 400384
      %v390 = vsel %vm388, %v372, 0
      %vm392 = vcmask 1040384
      %v394 = vsel %vm392, %v164, 0
      %v397 = vsel %vm392, %v165, 0
      %399 = vmatpush.msra.mxu0 0.0
      %400 = vmatpush.msra.mxu0 0.0
      %401 = vmatpush.msra.mxu0 0.0
      %402 = vmatpush.msra.mxu0 0.0
      %403 = vmatpush.msra.mxu0 0.0
      %404 = vmatpush.msra.mxu0 0.0
      %405 = vmatpush.msra.mxu0 0.0
      %406 = vmatpush.msra.mxu0 0.0
      %407 = vmatpush.msra.mxu0 0.0
      %408 = vmatpush.msra.mxu0 %v394
      %409 = vmatpush.msra.mxu0 %v162
      %410 = vmatpush.msra.mxu0 %v160
      %411 = vmatpush.msra.mxu0 %v158
      %412 = vmatpush.msra.mxu0 %v156
      %413 = vmatpush.msra.mxu0 %v154
      %414 = vmatpush.msra.mxu0 %v152
      %415 = vmatmul.f32.gmra.mxu0 %v390
      %v416 = vpop.f32.mrf.mxu0
      %v417 = vadd.f32 0.0, %v416
      %418 = vdwg.mxu0
      %419 = vmatpush.msra.mxu0 0.0
      %420 = vmatpush.msra.mxu0 0.0
      %421 = vmatpush.msra.mxu0 0.0
      %422 = vmatpush.msra.mxu0 0.0
      %423 = vmatpush.msra.mxu0 0.0
      %424 = vmatpush.msra.mxu0 0.0
      %425 = vmatpush.msra.mxu0 0.0
      %426 = vmatpush.msra.mxu0 0.0
      %427 = vmatpush.msra.mxu0 0.0
      %428 = vmatpush.msra.mxu0 %v397
      %429 = vmatpush.msra.mxu0 %v163
      %430 = vmatpush.msra.mxu0 %v161
      %431 = vmatpush.msra.mxu0 %v159
      %432 = vmatpush.msra.mxu0 %v157
      %433 = vmatpush.msra.mxu0 %v155
      %434 = vmatpush.msra.mxu0 %v153
      %435 = vmatmul.f32.gmra.mxu0 %v390
      %v436 = vpop.f32.mrf.mxu0
      %v437 = vadd.f32 0.0, %v436
      %438 = vdwg.mxu0
      %439 = vst [vmem:[%s150] sm:$0x7f] %v417
      %440 = vst [vmem:[%s150 + $0x8] sm:$0x7f] %v437
      %s441 = scalar_lea.vmem %s143, 112
      %v442 = vld [vmem:[%s441] sm:$0xff]
      %v443 = vld [vmem:[%s441 + $0x8] sm:$0xff]
      %v444 = vld [vmem:[%s441 + $0x10] sm:$0xff]
      %v445 = vld [vmem:[%s441 + $0x18] sm:$0xff]
      %v446 = vld [vmem:[%s441 + $0x20] sm:$0xff]
      %v447 = vld [vmem:[%s441 + $0x28] sm:$0xff]
      %v448 = vld [vmem:[%s441 + $0x30] sm:$0xff]
      %v449 = vld [vmem:[%s441 + $0x38] sm:$0xff]
      %v450 = vld [vmem:[%s441 + $0x40] sm:$0xff]
      %v451 = vld [vmem:[%s441 + $0x48] sm:$0xff]
      %v452 = vld [vmem:[%s441 + $0x50] sm:$0xff]
      %v453 = vld [vmem:[%s441 + $0x58] sm:$0xff]
      %v454 = vld [vmem:[%s441 + $0x60] sm:$0x1]
      %v455 = vld [vmem:[%s441 + $0x68] sm:$0x1]
      %v456 = vld [vmem:[%s1] sm:$0xff]
      %v457 = vld [vmem:[%s1 + $0x8] sm:$0xff]
      %v458 = vld [vmem:[%s1 + $0x10] sm:$0xff]
      %v459 = vld [vmem:[%s1 + $0x18] sm:$0xff]
      %v460 = vld [vmem:[%s1 + $0x20] sm:$0xff]
      %v461 = vld [vmem:[%s1 + $0x28] sm:$0xff]
      %v462 = vld [vmem:[%s1 + $0x30] sm:$0xff]
      %v463 = vld [vmem:[%s1 + $0x38] sm:$0xff]
      %v464 = vld [vmem:[%s1 + $0x40] sm:$0xff]
      %v465 = vld [vmem:[%s1 + $0x48] sm:$0xff]
      %v466 = vld [vmem:[%s1 + $0x50] sm:$0xff]
      %v467 = vld [vmem:[%s1 + $0x58] sm:$0xff]
      %v468 = vld [vmem:[%s1 + $0x60] sm:$0xff]
      %v469 = vld [vmem:[%s1 + $0x68] sm:$0xff]
      %v470 = vld [vmem:[%s1 + $0x70] sm:$0xff]
      %v471 = vld [vmem:[%s1 + $0x78] sm:$0xff]
      %v472 = vld [vmem:[%s1 + $0x80] sm:$0xff]
      %v473 = vld [vmem:[%s1 + $0x88] sm:$0xff]
      %v474 = vld [vmem:[%s1 + $0x90] sm:$0xff]
      %v475 = vld [vmem:[%s1 + $0x98] sm:$0xff]
      %v476 = vld [vmem:[%s1 + $0xa0] sm:$0xff]
      %v477 = vld [vmem:[%s1 + $0xa8] sm:$0xff]
      %v478 = vld [vmem:[%s1 + $0xb0] sm:$0xff]
      %v479 = vld [vmem:[%s1 + $0xb8] sm:$0xff]
      %v480 = vld [vmem:[%s1 + $0xc0] sm:$0xff]
      %v481 = vld [vmem:[%s1 + $0xc8] sm:$0xff]
      %v482 = vld [vmem:[%s1 + $0xd0] sm:$0xff]
      %v483 = vld [vmem:[%s1 + $0xd8] sm:$0xff]
      %v484 = vld [vmem:[%s1 + $0xe0] sm:$0xff]
      %v485 = vld [vmem:[%s1 + $0xe8] sm:$0xff]
      %v486 = vld [vmem:[%s1 + $0xf0] sm:$0xff]
      %v487 = vld [vmem:[%s1 + $0xf8] sm:$0xff]
      %488 = vmatpush.msra.mxu0 %v471
      %489 = vmatpush.msra.mxu0 %v470
      %490 = vmatpush.msra.mxu0 %v469
      %491 = vmatpush.msra.mxu0 %v468
      %492 = vmatpush.msra.mxu0 %v467
      %493 = vmatpush.msra.mxu0 %v466
      %494 = vmatpush.msra.mxu0 %v465
      %495 = vmatpush.msra.mxu0 %v464
      %496 = vmatpush.msra.mxu0 %v463
      %497 = vmatpush.msra.mxu0 %v462
      %498 = vmatpush.msra.mxu0 %v461
      %499 = vmatpush.msra.mxu0 %v460
      %500 = vmatpush.msra.mxu0 %v459
      %501 = vmatpush.msra.mxu0 %v458
      %502 = vmatpush.msra.mxu0 %v457
      %503 = vmatpush.msra.mxu0 %v456
      %504 = vmatmul.f32.gmra.mxu0 %v442
      %v505 = vpop.f32.mrf.mxu0
      %v506 = vadd.f32 0.0, %v505
      %507 = vmatmul.f32.gmra.mxu0 %v444
      %v508 = vpop.f32.mrf.mxu0
      %v509 = vadd.f32 0.0, %v508
      %510 = vmatmul.f32.gmra.mxu0 %v446
      %v511 = vpop.f32.mrf.mxu0
      %v512 = vadd.f32 0.0, %v511
      %513 = vmatmul.f32.gmra.mxu0 %v448
      %v514 = vpop.f32.mrf.mxu0
      %v515 = vadd.f32 0.0, %v514
      %516 = vmatmul.f32.gmra.mxu0 %v450
      %v517 = vpop.f32.mrf.mxu0
      %v518 = vadd.f32 0.0, %v517
      %519 = vmatmul.f32.gmra.mxu0 %v452
      %v520 = vpop.f32.mrf.mxu0
      %v521 = vadd.f32 0.0, %v520
      %522 = vmatmul.f32.gmra.mxu0 %v454
      %v523 = vpop.f32.mrf.mxu0
      %v524 = vadd.f32 0.0, %v523
      %525 = vdwg.mxu0
      %526 = vmatpush.msra.mxu0 %v487
      %527 = vmatpush.msra.mxu0 %v486
      %528 = vmatpush.msra.mxu0 %v485
      %529 = vmatpush.msra.mxu0 %v484
      %530 = vmatpush.msra.mxu0 %v483
      %531 = vmatpush.msra.mxu0 %v482
      %532 = vmatpush.msra.mxu0 %v481
      %533 = vmatpush.msra.mxu0 %v480
      %534 = vmatpush.msra.mxu0 %v479
      %535 = vmatpush.msra.mxu0 %v478
      %536 = vmatpush.msra.mxu0 %v477
      %537 = vmatpush.msra.mxu0 %v476
      %538 = vmatpush.msra.mxu0 %v475
      %539 = vmatpush.msra.mxu0 %v474
      %540 = vmatpush.msra.mxu0 %v473
      %541 = vmatpush.msra.mxu0 %v472
      %542 = vmatmul.f32.gmra.mxu0 %v443
      %v543 = vpop.f32.mrf.mxu0
      %v544 = vadd.f32 %v506, %v543
      %545 = vmatmul.f32.gmra.mxu0 %v445
      %v546 = vpop.f32.mrf.mxu0
      %v547 = vadd.f32 %v509, %v546
      %548 = vmatmul.f32.gmra.mxu0 %v447
      %v549 = vpop.f32.mrf.mxu0
      %v550 = vadd.f32 %v512, %v549
      %551 = vmatmul.f32.gmra.mxu0 %v449
      %v552 = vpop.f32.mrf.mxu0
      %v553 = vadd.f32 %v515, %v552
      %554 = vmatmul.f32.gmra.mxu0 %v451
      %v555 = vpop.f32.mrf.mxu0
      %v556 = vadd.f32 %v518, %v555
      %557 = vmatmul.f32.gmra.mxu0 %v453
      %v558 = vpop.f32.mrf.mxu0
      %v559 = vadd.f32 %v521, %v558
      %560 = vmatmul.f32.gmra.mxu0 %v455
      %v561 = vpop.f32.mrf.mxu0
      %v562 = vadd.f32 %v524, %v561
      %563 = vdwg.mxu0
      %v564 = vsel %vm274, %v544, -inf
      %v565 = vsel %vm274, %v547, -inf
      %v566 = vsel %vm274, %v550, -inf
      %v567 = vsel %vm274, %v553, -inf
      %v568 = vsel %vm274, %v556, -inf
      %v569 = vmax.f32 %v564, %v568
      %v570 = vsel %vm274, %v559, -inf
      %v571 = vmax.f32 %v565, %v570
      %v572 = vsel %vm283, %v562, -inf
      %v573 = vmax.f32 %v566, %v572
      %v574 = vmax.f32 %v569, %v571
      %v575 = vmax.f32 %v573, %v567
      %v576 = vmax.f32 %v574, %v575
      %v577 = vrot.slane %v576, 4
      %v578 = vmax.f32 %v576, %v577
      %v579 = vrot.slane %v578, 2
      %v580 = vmax.f32 %v578, %v579
      %v581 = vrot.slane %v580, 1
      %v582 = vmax.f32 %v580, %v581
      %v583 = vsub.f32 %v544, %v582
      %v584 = vsub.f32 %v547, %v582
      %v585 = vsub.f32 %v550, %v582
      %v586 = vsub.f32 %v553, %v582
      %v587 = vsub.f32 %v556, %v582
      %v588 = vsub.f32 %v559, %v582
      %v589 = vsub.f32 %v562, %v582
      %v590 = vmul.f32 %v583, 1.442695
      %v591 = vpow.pop %v590
      %v592 = vmul.f32 %v584, 1.442695
      %v593 = vpow.pop %v592
      %v594 = vmul.f32 %v585, 1.442695
      %v595 = vpow.pop %v594
      %v596 = vmul.f32 %v586, 1.442695
      %v597 = vpow.pop %v596
      %v598 = vmul.f32 %v587, 1.442695
      %v599 = vpow.pop %v598
      %v600 = vmul.f32 %v588, 1.442695
      %v601 = vpow.pop %v600
      %v602 = vmul.f32 %v589, 1.442695
      %v603 = vpow.pop %v602
      %v604 = vsel %vm274, %v591, 0.0
      %v605 = vsel %vm274, %v593, 0.0
      %v606 = vadd.f32 %v604, %v605
      %v607 = vsel %vm274, %v595, 0.0
      %v608 = vadd.f32 %v606, %v607
      %v609 = vsel %vm274, %v597, 0.0
      %v610 = vadd.f32 %v608, %v609
      %v611 = vsel %vm274, %v599, 0.0
      %v612 = vadd.f32 %v610, %v611
      %v613 = vsel %vm274, %v601, 0.0
      %v614 = vadd.f32 %v612, %v613
      %v615 = vsel %vm283, %v603, 0.0
      %v616 = vadd.f32 %v614, %v615
      %v617 = vrot.slane %v616, 4
      %v618 = vadd.f32 %v616, %v617
      %v619 = vrot.slane %v618, 2
      %v620 = vadd.f32 %v618, %v619
      %v621 = vrot.slane %v620, 1
      %v622 = vadd.f32 %v620, %v621
      %v623 = vrcp.pop %v622
      %v624 = vmul.f32 %v622, %v623
      %v625 = vsub.f32 1.0, %v624
      %v626 = vmul.f32 %v623, %v625
      %v627 = vadd.f32 %v623, %v626
      %vm628 = vweird.f32 %v622
      %vm629 = vweird.f32 %v623
      %vm630 = vmor %vm628, %vm629
      %v631 = vsel %vm630, %v623, %v627
      %v632 = vand.u32 2147483647, %v622
      %vm633 = vcmp.eq.f32.partialorder %v632, 8.507059e+37
      %v634 = vand.u32 %v622, 2147483648
      %v635 = vor.u32 1.1754944e-38, %v634
      %v636 = vsel %vm633, %v635, %v631
      %v637 = vmul.f32 %v591, %v636
      %v638 = vmul.f32 %v593, %v636
      %v639 = vmul.f32 %v595, %v636
      %v640 = vmul.f32 %v597, %v636
      %v641 = vmul.f32 %v599, %v636
      %v642 = vmul.f32 %v601, %v636
      %v643 = vmul.f32 %v603, %v636
      %644 = vxpose.xlu0.b32.start [1/16] %v637, 128
      %645 = vxpose.xlu0.b32.cont [2/16] %v638, 128
      %646 = vxpose.xlu0.b32.cont [3/16] %v639, 128
      %647 = vxpose.xlu0.b32.cont [4/16] %v640, 128
      %648 = vxpose.xlu0.b32.cont [5/16] %v641, 128
      %649 = vxpose.xlu0.b32.cont [6/16] %v642, 128
      %650 = vxpose.xlu0.b32.cont [7/16] %v643, 128
      %651 = vxpose.xlu0.b32.cont [8/16] 0.0, 128
      %652 = vxpose.xlu0.b32.cont [9/16] 0.0, 128
      %653 = vxpose.xlu0.b32.cont [10/16] 0.0, 128
      %654 = vxpose.xlu0.b32.cont [11/16] 0.0, 128
      %655 = vxpose.xlu0.b32.cont [12/16] 0.0, 128
      %656 = vxpose.xlu0.b32.cont [13/16] 0.0, 128
      %657 = vxpose.xlu0.b32.cont [14/16] 0.0, 128
      %658 = vxpose.xlu0.b32.cont [15/16] 0.0, 128
      %659 = vxpose.xlu0.b32.end [16/16] 0.0, 128
      %v660 = vpop.trf.xlu0
      %v661 = vpop.trf.xlu0
      %v662 = vpop.trf.xlu0
      %v663 = vpop.trf.xlu0
      %v664 = vpop.trf.xlu0
      %v665 = vpop.trf.xlu0
      %v666 = vpop.trf.xlu0
      %v667 = vpop.trf.xlu0
      %v668 = vpop.trf.xlu0
      %v669 = vpop.trf.xlu0
      %v670 = vpop.trf.xlu0
      %v671 = vpop.trf.xlu0
      %v672 = vpop.trf.xlu0
      %v673 = vpop.trf.xlu0
      %v674 = vpop.trf.xlu0
      %v675 = vpop.trf.xlu0
      %v677 = vsel %vm388, %v660, 0
      %v680 = vsel %vm392, %v454, 0
      %v683 = vsel %vm392, %v455, 0
      %685 = vmatpush.msra.mxu0 0.0
      %686 = vmatpush.msra.mxu0 0.0
      %687 = vmatpush.msra.mxu0 0.0
      %688 = vmatpush.msra.mxu0 0.0
      %689 = vmatpush.msra.mxu0 0.0
      %690 = vmatpush.msra.mxu0 0.0
      %691 = vmatpush.msra.mxu0 0.0
      %692 = vmatpush.msra.mxu0 0.0
      %693 = vmatpush.msra.mxu0 0.0
      %694 = vmatpush.msra.mxu0 %v680
      %695 = vmatpush.msra.mxu0 %v452
      %696 = vmatpush.msra.mxu0 %v450
      %697 = vmatpush.msra.mxu0 %v448
      %698 = vmatpush.msra.mxu0 %v446
      %699 = vmatpush.msra.mxu0 %v444
      %700 = vmatpush.msra.mxu0 %v442
      %701 = vmatmul.f32.gmra.mxu0 %v677
      %v702 = vpop.f32.mrf.mxu0
      %v703 = vadd.f32 0.0, %v702
      %704 = vdwg.mxu0
      %705 = vmatpush.msra.mxu0 0.0
      %706 = vmatpush.msra.mxu0 0.0
      %707 = vmatpush.msra.mxu0 0.0
      %708 = vmatpush.msra.mxu0 0.0
      %709 = vmatpush.msra.mxu0 0.0
      %710 = vmatpush.msra.mxu0 0.0
      %711 = vmatpush.msra.mxu0 0.0
      %712 = vmatpush.msra.mxu0 0.0
      %713 = vmatpush.msra.mxu0 0.0
      %714 = vmatpush.msra.mxu0 %v683
      %715 = vmatpush.msra.mxu0 %v453
      %716 = vmatpush.msra.mxu0 %v451
      %717 = vmatpush.msra.mxu0 %v449
      %718 = vmatpush.msra.mxu0 %v447
      %719 = vmatpush.msra.mxu0 %v445
      %720 = vmatpush.msra.mxu0 %v443
      %721 = vmatmul.f32.gmra.mxu0 %v677
      %v722 = vpop.f32.mrf.mxu0
      %v723 = vadd.f32 0.0, %v722
      %724 = vdwg.mxu0
      %s725 = scalar_lea.vmem %s150, 16
      %726 = vst [vmem:[%s725] sm:$0x7f] %v703
      %727 = vst [vmem:[%s725 + $0x8] sm:$0x7f] %v723
      %s728 = smul.u32 2, %s13
      %p729 = scmp.lt.s32.totalorder %s728, 3
      %s730 = scalar_select %p729, %s728, 3
      %s731 = smul.addr %s730, 2
      %s732 = smul.addr %s731, 8
      %s733 = scalar_lea.vmem %s2, %s732
      // Predicated region
      $region29: #{cls_attention.1} parent=27 // pred_check
        %p734 = pneg %p78
      $region30: #{cls_attention.1} parent=27 // pred_check_branch
        %736 = sbr.rel (%p734) target = $region32
      $region31: #{cls_attention.1} parent=27 // pred_region
        %s737 = smul.u32 2, %s13
      $region32: #{cls_attention.1} parent=27 // pred_fallthru
        _
    $region28: #{cls_attention.1} parent=5 // pred_fallthru
      _
    %p738 = scmp.le.s32.totalorder 2, %s8
    // Predicated region
    $region33: #{cls_attention.1} parent=5 // pred_check
      %p739 = pneg %p738
    $region34: #{cls_attention.1} parent=5 // pred_check_branch
      %741 = sbr.rel (%p739) target = $region36
    $region35: #{cls_attention.1} parent=5 // pred_region
      %s742 = ssub.s32 %s8, 2
      // Predicated region
      $region37: #{cls_attention.1} parent=35 // pred_check
        %p743 = pneg %p84
      $region38: #{cls_attention.1} parent=35 // pred_check_branch
        %745 = sbr.rel (%p743) target = $region40
      $region39: #{cls_attention.1} parent=35 // pred_region
        %s746 = smul.u32 2, %s14
        %p747 = scmp.lt.s32.totalorder %s746, 3
        %s748 = scalar_select %p747, %s746, 3
        %s749 = smul.addr %s748, 2
        %s750 = smul.addr %s749, 8
        %s751 = scalar_lea.vmem %s2, %s750
      $region40: #{cls_attention.1} parent=35 // pred_fallthru
        _
    $region36: #{cls_attention.1} parent=5 // pred_fallthru
      _
  $region6: #{cls_attention.1} parent=0 // loop_footer
    %s12 = sadd.s32 1, %s8
  $region7: #{cls_attention.1} parent=0 // loop_footer_branch
    %7 = sbr.rel target = $region3
  $region8: #{cls_attention.1} parent=0 // loop_exit
    _

</llo_original>
